<compile_context>
chip_gen: v7x
topology: tpu7x:2x2x1
jax: 0.10.0
libtpu: 0.0.40
codegen_flags: <defaults>
</compile_context>

<pallas_src>
import functools

import jax
import jax.numpy as jnp
from jax import lax
from jax.experimental import pallas as pl
from jax.experimental.pallas import tpu as pltpu


def _round_up(x: int, m: int) -> int:
    return ((x + m - 1) // m) * m


def _wfl_partial_kernel(logits_ref, tgt_ref, out_ref, *, n):
    # logits_ref: (C, TN)  native dtype -- classes on sublanes, batch lane-dense
    # tgt_ref:    (1, TN)  int32
    # out_ref:    (1, 8, 128) f32 -- this block's partial sum of per-sample CE, broadcast
    #             across the slab so the store is an unmasked lane-dense vst.
    i = pl.program_id(0)
    logits = logits_ref[...].astype(jnp.float32)        # cast in-kernel (DMA native dtype)
    tgt = tgt_ref[...]                                  # (1, TN)
    C, TN = logits.shape

    # Per-sample CE = logsumexp over classes - target logit (one-hot gather; no dyn gather).
    cls = lax.broadcasted_iota(jnp.int32, (C, TN), 0)
    onehot = cls == tgt                                                     # (C, TN)
    m = jnp.max(logits, axis=0, keepdims=True)                              # (1, TN)
    lse = m + jnp.log(jnp.sum(jnp.exp(logits - m), axis=0, keepdims=True))  # (1, TN)
    tgt_logit = jnp.sum(jnp.where(onehot, logits, 0.0), axis=0, keepdims=True)
    ce = lse - tgt_logit                                                    # (1, TN)

    last = pl.num_programs(0) - 1

    @pl.when(i < last)
    def _full_block():
        out_ref[...] = jnp.full(out_ref.shape, jnp.sum(ce), jnp.float32)

    @pl.when(i == last)
    def _ragged_tail():
        # Mask padded / out-of-range lanes of the final (possibly partial) block only.
        col = lax.broadcasted_iota(jnp.int32, (1, TN), 1) + i * TN
        ce_masked = jnp.where(col < n, ce, 0.0)
        out_ref[...] = jnp.full(out_ref.shape, jnp.sum(ce_masked), jnp.float32)


def weighted_focal_loss(inputs, targets, alpha, gamma=2, *,
                        target_block_bytes=4 * 1024 * 1024):
    """inputs: (N, C) float logits, targets: (N,) int class ids, alpha: (C,) float.

    Returns the scalar weighted focal loss (same math as the PyTorch module).
    """
    N, C = inputs.shape
    itemsize = jnp.dtype(inputs.dtype).itemsize

    # Adaptive, 128-aligned batch tile: multi-MiB logits blocks, capped by N.
    tn = max(128, target_block_bytes // (itemsize * C))
    tn = _round_up(min(tn, N), 128)

    # Lane-dense layout; pad batch only to the next multiple of 128 (fuses with transpose).
    n_pad = _round_up(N, 128)
    logits_t = jnp.transpose(inputs)                                   # (C, N), native dtype
    if n_pad != N:
        logits_t = jnp.pad(logits_t, ((0, 0), (0, n_pad - N)))
    tgt2d = jnp.pad(targets.astype(jnp.int32), (0, n_pad - N)).reshape(1, n_pad)

    grid_n = pl.cdiv(n_pad, tn)
    kernel = functools.partial(_wfl_partial_kernel, n=N)

    partials = pl.pallas_call(
        kernel,
        out_shape=jax.ShapeDtypeStruct((grid_n, 8, 128), jnp.float32),
        grid=(grid_n,),
        in_specs=[
            pl.BlockSpec((C, tn), lambda i: (0, i)),    # logits tile (lane-dense batch)
            pl.BlockSpec((1, tn), lambda i: (0, i)),    # targets tile
        ],
        out_specs=pl.BlockSpec((1, 8, 128), lambda i: (i, 0, 0)),
        compiler_params=pltpu.CompilerParams(
            # Per-block partial sums -> independent grid steps -> both TCs on v7x.
            dimension_semantics=("parallel",),
            vmem_limit_bytes=32 * 1024 * 1024,
        ),
        cost_estimate=pl.CostEstimate(
            flops=6 * N * C,
            transcendentals=N * C,
            bytes_accessed=N * C * itemsize + N * 4 + grid_n * 8 * 128 * 4,
        ),
    )(logits_t, tgt2d)

    # Tiny O(N)/O(1) finalize in plain JAX: alpha gather, mean-CE, pt, focal factor.
    ce_mean = jnp.sum(partials[:, 0, 0]) / N
    at_mean = jnp.mean(alpha.astype(jnp.float32)[targets.astype(jnp.int32)])
    pt = jnp.exp(-ce_mean)
    gamma_exp = int(gamma) if float(gamma).is_integer() else float(gamma)
    return at_mean * (1.0 - pt) ** gamma_exp * ce_mean


if __name__ == "__main__":
    # Small deterministic example: batch=64 samples, 4 classes.
    N, C = 64, 4
    gamma = 2

    key = jax.random.PRNGKey(0)
    k_logits, k_tgt = jax.random.split(key)
    inputs = jax.random.normal(k_logits, (N, C), dtype=jnp.float32)
    targets = jax.random.randint(k_tgt, (N,), 0, C, dtype=jnp.int32)
    alpha = jnp.array([0.25, 0.5, 0.75, 1.0], dtype=jnp.float32)

    loss = weighted_focal_loss(inputs, targets, alpha, gamma=gamma)
    loss = jax.block_until_ready(loss)

    # Pure-JAX reference of the PyTorch forward.
    logp = jax.nn.log_softmax(inputs, axis=-1)
    ce_ref = -jnp.mean(jnp.take_along_axis(logp, targets[:, None], axis=-1))
    at_ref = alpha[targets]
    pt_ref = jnp.exp(-ce_ref)
    ref = jnp.mean(at_ref * (1.0 - pt_ref) ** gamma * ce_ref)

    assert loss.shape == (), f"expected scalar, got {loss.shape}"
    assert jnp.allclose(loss, ref, atol=1e-5, rtol=1e-5), (loss, ref)

    print("KERNEL_OK")
</pallas_src>

<mosaic_0001>
module attributes {stable_mosaic.version = 11 : i64} {
  func.func @_wfl_partial_kernel(%arg0: i32, %arg1: memref<4x128xf32, #tpu.memory_space<vmem>>, %arg2: memref<1x128xi32, #tpu.memory_space<vmem>>, %arg3: memref<1x8x128xf32, #tpu.memory_space<vmem>>) attributes {dimension_semantics = [#tpu.dimension_semantics<parallel>], iteration_bounds = array<i64: 1>, scalar_prefetch = 0 : i64, scratch_operands = 0 : i64, tpu.core_type = #tpu.core_type<tc>, window_params = [{transform_indices = @transform_0, window_bounds = array<i64: 4, 128>}, {transform_indices = @transform_1, window_bounds = array<i64: 1, 128>}, {transform_indices = @transform_2, window_bounds = array<i64: 1, 8, 128>}]} {
    %c0 = arith.constant 0 : index
    %c0_0 = arith.constant 0 : index
    %0 = vector.load %arg1[%c0, %c0_0] : memref<4x128xf32, #tpu.memory_space<vmem>>, vector<4x128xf32>
    %c0_1 = arith.constant 0 : index
    %c0_2 = arith.constant 0 : index
    %1 = vector.load %arg2[%c0_1, %c0_2] : memref<1x128xi32, #tpu.memory_space<vmem>>, vector<1x128xi32>
    %2 = tpu.iota {dimensions = array<i32: 0>} : vector<4x128xi32>
    %3 = vector.broadcast %1 : vector<1x128xi32> to vector<4x128xi32>
    %4 = arith.cmpi eq, %2, %3 : vector<4x128xi32>
    %cst = arith.constant dense<0xFF800000> : vector<128xf32>
    %5 = vector.multi_reduction <maximumf>, %0, %cst [0] : vector<4x128xf32> to vector<128xf32>
    %6 = vector.shape_cast %5 : vector<128xf32> to vector<1x128xf32>
    %7 = vector.broadcast %6 : vector<1x128xf32> to vector<4x128xf32>
    %8 = arith.subf %0, %7 : vector<4x128xf32>
    %9 = math.exp %8 : vector<4x128xf32>
    %cst_3 = arith.constant dense<0.000000e+00> : vector<128xf32>
    %10 = vector.multi_reduction <add>, %9, %cst_3 [0] : vector<4x128xf32> to vector<128xf32>
    %11 = vector.shape_cast %10 : vector<128xf32> to vector<1x128xf32>
    %12 = math.log %11 : vector<1x128xf32>
    %13 = arith.addf %6, %12 : vector<1x128xf32>
    %cst_4 = arith.constant 0.000000e+00 : f32
    %14 = vector.broadcast %cst_4 : f32 to vector<4x128xf32>
    %15 = arith.select %4, %0, %14 : vector<4x128xi1>, vector<4x128xf32>
    %cst_5 = arith.constant dense<0.000000e+00> : vector<128xf32>
    %16 = vector.multi_reduction <add>, %15, %cst_5 [0] : vector<4x128xf32> to vector<128xf32>
    %17 = vector.shape_cast %16 : vector<128xf32> to vector<1x128xf32>
    %18 = arith.subf %13, %17 : vector<1x128xf32>
    %c0_i32 = arith.constant 0 : i32
    %19 = arith.cmpi slt, %arg0, %c0_i32 : i32
    %20 = arith.extui %19 : i1 to i32
    %c0_i32_6 = arith.constant 0 : i32
    %21 = arith.cmpi ne, %20, %c0_i32_6 : i32
    scf.if %21 {
      %25 = vector.shape_cast %18 : vector<1x128xf32> to vector<1x1x128xf32>
      %cst_9 = arith.constant dense<0.000000e+00> : vector<1xf32>
      %26 = vector.multi_reduction <add>, %25, %cst_9 [1, 2] : vector<1x1x128xf32> to vector<1xf32>
      %27 = vector.shape_cast %26 : vector<1xf32> to vector<1x1x1xf32>
      %28 = vector.extract %27[0, 0, 0] : f32 from vector<1x1x1xf32>
      %29 = vector.broadcast %28 : f32 to vector<1x8x128xf32>
      %c0_10 = arith.constant 0 : index
      %c0_11 = arith.constant 0 : index
      %c0_12 = arith.constant 0 : index
      %30 = vector.load %arg3[%c0_10, %c0_11, %c0_12] : memref<1x8x128xf32, #tpu.memory_space<vmem>>, vector<1x8x128xf32>
      tpu.vector_store %arg3[%c0_10, %c0_11, %c0_12], %29 {strides = array<i32>} : memref<1x8x128xf32, #tpu.memory_space<vmem>>, vector<1x8x128xf32>,
    } else {
    }
    %c0_i32_7 = arith.constant 0 : i32
    %22 = arith.cmpi eq, %arg0, %c0_i32_7 : i32
    %23 = arith.extui %22 : i1 to i32
    %c0_i32_8 = arith.constant 0 : i32
    %24 = arith.cmpi ne, %23, %c0_i32_8 : i32
    scf.if %24 {
      %25 = tpu.iota {dimensions = array<i32: 1>} : vector<1x128xi32>
      %c128_i32 = arith.constant 128 : i32
      %26 = arith.muli %arg0, %c128_i32 : i32
      %27 = vector.broadcast %26 : i32 to vector<1x128xi32>
      %28 = arith.addi %25, %27 : vector<1x128xi32>
      %c64_i32 = arith.constant 64 : i32
      %29 = vector.broadcast %c64_i32 : i32 to vector<1x128xi32>
      %30 = arith.cmpi slt, %28, %29 : vector<1x128xi32>
      %cst_9 = arith.constant 0.000000e+00 : f32
      %31 = vector.broadcast %cst_9 : f32 to vector<1x128xf32>
      %32 = arith.select %30, %18, %31 : vector<1x128xi1>, vector<1x128xf32>
      %33 = vector.shape_cast %32 : vector<1x128xf32> to vector<1x1x128xf32>
      %cst_10 = arith.constant dense<0.000000e+00> : vector<1xf32>
      %34 = vector.multi_reduction <add>, %33, %cst_10 [1, 2] : vector<1x1x128xf32> to vector<1xf32>
      %35 = vector.shape_cast %34 : vector<1xf32> to vector<1x1x1xf32>
      %36 = vector.extract %35[0, 0, 0] : f32 from vector<1x1x1xf32>
      %37 = vector.broadcast %36 : f32 to vector<1x8x128xf32>
      %c0_11 = arith.constant 0 : index
      %c0_12 = arith.constant 0 : index
      %c0_13 = arith.constant 0 : index
      %38 = vector.load %arg3[%c0_11, %c0_12, %c0_13] : memref<1x8x128xf32, #tpu.memory_space<vmem>>, vector<1x8x128xf32>
      tpu.vector_store %arg3[%c0_11, %c0_12, %c0_13], %37 {strides = array<i32>} : memref<1x8x128xf32, #tpu.memory_space<vmem>>, vector<1x8x128xf32>,
    } else {
    }
    return
  }
  func.func @transform_0(%arg0: i32) -> (i32, i32) {
    %c0_i32 = arith.constant 0 : i32
    %c0_i32_0 = arith.constant 0 : i32
    return %c0_i32, %arg0 : i32, i32
  }
  func.func @transform_1(%arg0: i32) -> (i32, i32) {
    %c0_i32 = arith.constant 0 : i32
    %c0_i32_0 = arith.constant 0 : i32
    return %c0_i32, %arg0 : i32, i32
  }
  func.func @transform_2(%arg0: i32) -> (i32, i32, i32) {
    %c0_i32 = arith.constant 0 : i32
    %c0_i32_0 = arith.constant 0 : i32
    %c0_i32_1 = arith.constant 0 : i32
    return %arg0, %c0_i32, %c0_i32_0 : i32, i32, i32
  }
}

</mosaic_0001>

<llo_original>
// kernel: tpu_custom_call.1
$region0: #{tpu_custom_call.1}
  #allocation0 [shape = 'u32[]', space=smem, size = 0x4, offset = 0x4, fixed_abs, tag = 'smem constant byte address 0x4 - core index']
  #allocation1 [shape = 'u32[144,128]{1,0:T(1,128)}', space=vmem, size = 0x12000, scoped, tag = 'internal scratch']
  %s0 = inlined_call_operand.hbm [shape: f32[4,128], index: 0, kind: input, shape index: {}]
  %s1 = inlined_call_operand.vmem [shape: s32[1,128], index: 1, kind: input, shape index: {}]
  %s2 = inlined_call_operand.hbm [shape: f32[1,8,128], index: 2, kind: output, shape index: {}]
  %s3 = sld [smem:[#allocation0]]
  $region30: #{tpu_custom_call.1} parent=0
    _
  %s5 = ssub.s32 1, %s3
  %s6 = scalar_select 0, %s5, %s3
  $region1: #{tpu_custom_call.1} parent=0
    #allocation2 [shape = 'u8[2048]{0}', space=vmem, size = 0x800, scoped, tag = 'input window, operand 0, single buffered']
    #allocation3 [shape = 's32[1]{0}', space=sflag, size = 0x4, scoped, tag = 'scoped memory for tpu_custom_call.1']
    #allocation4 [shape = 's32[1]{0}', space=sflag, size = 0x4, scoped, tag = 'scoped memory for tpu_custom_call.1']
    #allocation5 [shape = 'u8[4096]{0}', space=vmem, size = 0x1000, scoped, tag = 'output window, operand 0, single buffered']
    %7 = vsyncpa [#allocation3], 0
    %8 = vsyncpa [#allocation4], 0
    // Predicated region
    $region2: #{tpu_custom_call.1} parent=1 // pred_check
      _
    $region3: #{tpu_custom_call.1} parent=1 // pred_check_branch
      %10 = sbr.rel (0) target = $region5
    $region4: #{tpu_custom_call.1} parent=1 // pred_region
      %s12 = ssub.s32 64, 64
      %13 = vsyncadd [#allocation3], %s12
      %s15 = sshll.u32 [#allocation2], 4
      %s16 = int_to_ptr.vmem [resolvable:$true] %s15
      %18 = dma.hbm_to_vmem [thread:$0]  %s0, 64, %s16, [#allocation3]
    $region5: #{tpu_custom_call.1} parent=1 // pred_fallthru
      _
    // Predicated region
    $region6: #{tpu_custom_call.1} parent=1 // pred_check
      _
    $region7: #{tpu_custom_call.1} parent=1 // pred_check_branch
      %20 = sbr.rel (0) target = $region9
    $region8: #{tpu_custom_call.1} parent=1 // pred_region
      _
    $region9: #{tpu_custom_call.1} parent=1 // pred_fallthru
      _
    // Predicated region
    $region10: #{tpu_custom_call.1} parent=1 // pred_check
      _
    $region11: #{tpu_custom_call.1} parent=1 // pred_check_branch
      %22 = sbr.rel (0) target = $region13
    $region12: #{tpu_custom_call.1} parent=1 // pred_region
      %23 = dma.done [#allocation3], 64
    $region13: #{tpu_custom_call.1} parent=1 // pred_fallthru
      _
    %v24 = vld [vmem:[#allocation2] sm:$0xf]
    %v25 = vld [vmem:[%s1] sm:$0x1]
    %v26 = vlaneseq
    %v27 = vshrl.u32 %v26, 7
    %v28 = vlaneseq
    %v29 = vshrl.u32 %v28, 7
    %v30 = vsub.s32 0, %v29
    %v31 = vrot.slane %v25, %v30
    %vm32 = vcmp.eq.s32.totalorder %v27, %v31
    %vm33 = vcmask 1043456
    %v34 = vsel %vm33, %v24, -inf
    %v35 = vrot.slane %v34, 4
    %v36 = vmax.f32 %v34, %v35
    %v37 = vrot.slane %v36, 2
    %v38 = vmax.f32 %v36, %v37
    %v39 = vrot.slane %v38, 1
    %v40 = vmax.f32 %v38, %v39
    %v41 = vsub.f32 %v24, %v40
    %v42 = vmul.f32 %v41, 1.442695
    %v43 = vpow.pop %v42
    %v44 = vsel %vm33, %v43, 0.0
    %v45 = vrot.slane %v44, 4
    %v46 = vadd.f32 %v44, %v45
    %v47 = vrot.slane %v46, 2
    %v48 = vadd.f32 %v46, %v47
    %v49 = vrot.slane %v48, 1
    %v50 = vadd.f32 %v48, %v49
    %v51 = vlog2.pop %v50
    %v52 = vmul.f32 %v51, 0.6931472
    %v53 = vadd.f32 %v40, %v52
    %v54 = vsel %vm32, %v24, 0.0
    %v55 = vsel %vm33, %v54, 0.0
    %v56 = vrot.slane %v55, 4
    %v57 = vadd.f32 %v55, %v56
    %v58 = vrot.slane %v57, 2
    %v59 = vadd.f32 %v57, %v58
    %v60 = vrot.slane %v59, 1
    %v61 = vadd.f32 %v59, %v60
    %v62 = vsub.f32 %v53, %v61
    %p63 = scmp.lt.s32.totalorder 0, 0
    // Predicated region
    $region14: #{tpu_custom_call.1} parent=1 // pred_check
      %p64 = pneg %p63
    $region15: #{tpu_custom_call.1} parent=1 // pred_check_branch
      %66 = sbr.rel (%p64) target = $region17
    $region16: #{tpu_custom_call.1} parent=1 // pred_region
      %vm67 = vcmask 1040384
      %v68 = vsel %vm67, %v62, 0.0
      %69 = vadd.xlane.f32.xlu0 %v68
      %v70 = vpop.xlane.xlu0 %69
      %v71 = vrot.slane %v70, 4
      %v72 = vadd.f32 %v70, %v71
      %v73 = vrot.slane %v72, 2
      %v74 = vadd.f32 %v72, %v73
      %v75 = vrot.slane %v74, 1
      %v76 = vadd.f32 %v74, %v75
      %s77 = vtos %v76
      %v78 = vstv %s77
      %79 = vst [vmem:[#allocation5] sm:$0xff] %v78
    $region17: #{tpu_custom_call.1} parent=1 // pred_fallthru
      _
    %p80 = scmp.eq.s32.totalorder 0, 0
    // Predicated region
    $region18: #{tpu_custom_call.1} parent=1 // pred_check
      %p81 = pneg %p80
    $region19: #{tpu_custom_call.1} parent=1 // pred_check_branch
      %83 = sbr.rel (%p81) target = $region21
    $region20: #{tpu_custom_call.1} parent=1 // pred_region
      %v84 = vlaneseq
      %v85 = vand.u32 %v84, 127
      %s86 = smul.u32 0, 128
      %v87 = vstv %s86
      %v88 = vadd.s32 %v85, %v87
      %vm89 = vcmp.lt.s32.totalorder %v88, 64
      %v90 = vsel %vm89, %v62, 0.0
      %vm91 = vcmask 1040384
      %v92 = vsel %vm91, %v90, 0.0
      %93 = vadd.xlane.f32.xlu0 %v92
      %v94 = vpop.xlane.xlu0 %93
      %v95 = vrot.slane %v94, 4
      %v96 = vadd.f32 %v94, %v95
      %v97 = vrot.slane %v96, 2
      %v98 = vadd.f32 %v96, %v97
      %v99 = vrot.slane %v98, 1
      %v100 = vadd.f32 %v98, %v99
      %s101 = vtos %v100
      %v102 = vstv %s101
      %103 = vst [vmem:[#allocation5] sm:$0xff] %v102
    $region21: #{tpu_custom_call.1} parent=1 // pred_fallthru
      _
    // Predicated region
    $region22: #{tpu_custom_call.1} parent=1 // pred_check
      _
    $region23: #{tpu_custom_call.1} parent=1 // pred_check_branch
      %105 = sbr.rel (0) target = $region25
    $region24: #{tpu_custom_call.1} parent=1 // pred_region
      %s107 = ssub.s32 128, 128
      %108 = vsyncadd [#allocation4], %s107
      %s110 = sshll.u32 [#allocation5], 4
      %s111 = int_to_ptr.vmem [resolvable:$true] %s110
      %113 = dma.vmem_to_hbm [thread:$0]  %s111, 128, %s2, [#allocation4]
    $region25: #{tpu_custom_call.1} parent=1 // pred_fallthru
      _
    // Predicated region
    $region26: #{tpu_custom_call.1} parent=1 // pred_check
      _
    $region27: #{tpu_custom_call.1} parent=1 // pred_check_branch
      %115 = sbr.rel (0) target = $region29
    $region28: #{tpu_custom_call.1} parent=1 // pred_region
      %116 = dma.done [#allocation4], 128
    $region29: #{tpu_custom_call.1} parent=1 // pred_fallthru
      _
    %117 = vsyncpa [#allocation3], 1
    %118 = vsyncpa [#allocation4], 1

</llo_original>
